<compile_context>
chip_gen: v5e
topology: v5e:2x2
jax: 0.10.0
libtpu: 0.0.40
codegen_flags: <defaults>
</compile_context>

<pallas_src>
import functools

import jax
import jax.numpy as jnp
from jax.experimental import pallas as pl
from jax.experimental.pallas import tpu as pltpu


def _seq2seq_kernel(onehot_ref, fused_ref, b1_ref, w2_ref, b2_ref, out_ref,
                    *, seq_len, batch_padded):
    # ---- fused embedding + shared Linear: one MXU pass -----------------------
    # one-hot rows are exact 0/1 even in bf16; up-cast to f32 so the row select
    # against the f32 fused table is exact (matches a true nn.Embedding gather).
    onehot = onehot_ref[...].astype(jnp.float32)                       # (M, V)
    h_pre = jnp.dot(onehot, fused_ref[...],
                    preferred_element_type=jnp.float32)                # (M, H) f32

    # ---- max-pool the PRE-activation over the sequence axis ------------------
    # rows are batch-major (r = b*S + s) so this reshape is layout-preserving
    # and the max is a cheap sublane reduce.
    pooled = jnp.max(h_pre.reshape(batch_padded, seq_len, h_pre.shape[-1]),
                     axis=1)                                           # (BP, H)

    # ---- bias + ReLU on the small pooled tile only ----------------------------
    # max_s(relu(x_s + b)) == relu(max_s(x_s) + b)  (relu(.+b) is monotone).
    act = jnp.maximum(pooled + b1_ref[...], 0.0)                       # (BP, H)

    # ---- output layer (lane- and sublane-padded -> full-tile unmasked store) --
    logits = jnp.dot(act.astype(w2_ref.dtype), w2_ref[...],
                     preferred_element_type=jnp.float32) + b2_ref[...]
    out_ref[...] = logits.astype(out_ref.dtype)


def seq2seq_forward(input_seq, emb_table, w1, b1, w2, b2, *,
                    matmul_dtype=jnp.float32):
    """input_seq: int32 [S, B] (seq-first, as torch.max(dim=0) implies).
    Returns float32 [B, num_classes].  `matmul_dtype` only affects the W2 matmul."""
    S, B = input_seq.shape
    V, E = emb_table.shape
    H = w1.shape[1]
    C = w2.shape[1]

    LANES, SUBLANES = 128, 8
    CP = pl.cdiv(C, LANES) * LANES          # lane-dense padded class dim
    BP = pl.cdiv(B, SUBLANES) * SUBLANES    # sublane-dense padded batch dim
    M = BP * S                              # flattened (batch-major) row count

    # Fold the embedding table into the shared Linear weight (outside the kernel).
    fused_w = jnp.dot(emb_table, w1,
                      preferred_element_type=jnp.float32)              # (V, H) f32

    # Batch-major flattened token ids, batch padded to BP rows (pad uses id 0,
    # results for those rows are discarded), then a bf16 one-hot built host-side.
    ids = jnp.pad(input_seq.T.astype(jnp.int32),
                  ((0, BP - B), (0, 0))).reshape(M)                    # (M,)
    onehot = jax.nn.one_hot(ids, V, dtype=jnp.bfloat16)                # (M, V)

    b1_2d = b1.reshape(1, H).astype(jnp.float32)
    w2_p = jnp.pad(w2, ((0, 0), (0, CP - C))).astype(matmul_dtype)     # (H, CP)
    b2_p = jnp.pad(b2.reshape(1, C),
                   ((0, 0), (0, CP - C))).astype(jnp.float32)          # (1, CP)

    kernel = functools.partial(_seq2seq_kernel, seq_len=S, batch_padded=BP)

    out_padded = pl.pallas_call(
        kernel,
        out_shape=jax.ShapeDtypeStruct((BP, CP), jnp.float32),
        grid_spec=pltpu.PrefetchScalarGridSpec(
            num_scalar_prefetch=0,
            grid=(1,),                                       # whole forward in one step
            in_specs=[
                pl.BlockSpec((M, V), lambda i: (0, 0)),      # one-hot tokens (bf16)
                pl.BlockSpec((V, H), lambda i: (0, 0)),      # fused emb @ W1 (f32)
                pl.BlockSpec((1, H), lambda i: (0, 0)),      # b1
                pl.BlockSpec((H, CP), lambda i: (0, 0)),     # W2 (lane-padded)
                pl.BlockSpec((1, CP), lambda i: (0, 0)),     # b2 (lane-padded)
            ],
            out_specs=pl.BlockSpec((BP, CP), lambda i: (0, 0)),
        ),
        compiler_params=pltpu.CompilerParams(
            dimension_semantics=("arbitrary",),
            # vmem_limit_bytes intentionally omitted: resident footprint ~120 KiB,
            # far below the scoped default on v5e / v6e / v7x.
        ),
    )(onehot, fused_w, b1_2d, w2_p, b2_p)

    return out_padded[:B, :C]


def seq2seq_reference(input_seq, emb_table, w1, b1, w2, b2):
    embedded = emb_table[input_seq]                      # (S, B, E)
    h = jnp.maximum(embedded @ w1 + b1, 0.0)             # (S, B, H)
    pooled = jnp.max(h, axis=0)                          # (B, H)
    return pooled @ w2 + b2                              # (B, C)


if __name__ == "__main__":
    VOCAB, EMB, HIDDEN, NUM_CLASSES = 64, 128, 128, 2
    SEQ, BATCH = 8, 4

    key = jax.random.PRNGKey(0)
    k_ids, k_emb, k_w1, k_b1, k_w2, k_b2 = jax.random.split(key, 6)

    input_seq = jax.random.randint(k_ids, (SEQ, BATCH), 0, VOCAB, dtype=jnp.int32)
    emb_table = jax.random.normal(k_emb, (VOCAB, EMB), dtype=jnp.float32) * 0.1
    w1 = jax.random.normal(k_w1, (EMB, HIDDEN), dtype=jnp.float32) * 0.05
    b1 = jax.random.normal(k_b1, (HIDDEN,), dtype=jnp.float32) * 0.05
    w2 = jax.random.normal(k_w2, (HIDDEN, NUM_CLASSES), dtype=jnp.float32) * 0.05
    b2 = jax.random.normal(k_b2, (NUM_CLASSES,), dtype=jnp.float32) * 0.05

    ref = seq2seq_reference(input_seq, emb_table, w1, b1, w2, b2)

    # f32 path (matches the PyTorch module's numerics).
    out = seq2seq_forward(input_seq, emb_table, w1, b1, w2, b2)
    out = jax.block_until_ready(out)
    assert out.shape == (BATCH, NUM_CLASSES)
    assert jnp.allclose(out, ref, atol=1e-4, rtol=1e-4), (out, ref)

    # bf16 W2 path (exact embedding gather retained; only the tiny output matmul
    # is bf16) — loose check.
    out_bf16 = seq2seq_forward(input_seq, emb_table, w1, b1, w2, b2,
                               matmul_dtype=jnp.bfloat16)
    out_bf16 = jax.block_until_ready(out_bf16)
    assert jnp.allclose(out_bf16, ref, atol=5e-2, rtol=5e-2), (out_bf16, ref)

    print("KERNEL_OK")
</pallas_src>

<mosaic_0001>
module attributes {stable_mosaic.version = 11 : i64} {
  func.func @_seq2seq_kernel(%arg0: i32, %arg1: memref<64x64xbf16, #tpu.memory_space<vmem>>, %arg2: memref<64x128xf32, #tpu.memory_space<vmem>>, %arg3: memref<1x128xf32, #tpu.memory_space<vmem>>, %arg4: memref<128x128xf32, #tpu.memory_space<vmem>>, %arg5: memref<1x128xf32, #tpu.memory_space<vmem>>, %arg6: memref<8x128xf32, #tpu.memory_space<vmem>>) attributes {dimension_semantics = [#tpu.dimension_semantics<arbitrary>], iteration_bounds = array<i64: 1>, scalar_prefetch = 0 : i64, scratch_operands = 0 : i64, tpu.core_type = #tpu.core_type<tc>, window_params = [{pipeline_mode = #tpu.pipeline_mode<synchronous>, transform_indices = @transform_0, window_bounds = array<i64: 64, 64>}, {pipeline_mode = #tpu.pipeline_mode<synchronous>, transform_indices = @transform_1, window_bounds = array<i64: 64, 128>}, {pipeline_mode = #tpu.pipeline_mode<synchronous>, transform_indices = @transform_2, window_bounds = array<i64: 1, 128>}, {pipeline_mode = #tpu.pipeline_mode<synchronous>, transform_indices = @transform_3, window_bounds = array<i64: 128, 128>}, {pipeline_mode = #tpu.pipeline_mode<synchronous>, transform_indices = @transform_4, window_bounds = array<i64: 1, 128>}, {pipeline_mode = #tpu.pipeline_mode<synchronous>, transform_indices = @transform_5, window_bounds = array<i64: 8, 128>}]} {
    %c0 = arith.constant 0 : index
    %c0_0 = arith.constant 0 : index
    %0 = vector.load %arg1[%c0, %c0_0] : memref<64x64xbf16, #tpu.memory_space<vmem>>, vector<64x64xbf16>
    %1 = arith.extf %0 : vector<64x64xbf16> to vector<64x64xf32>
    %c0_1 = arith.constant 0 : index
    %c0_2 = arith.constant 0 : index
    %2 = vector.load %arg2[%c0_1, %c0_2] : memref<64x128xf32, #tpu.memory_space<vmem>>, vector<64x128xf32>
    %cst = arith.constant dense<0.000000e+00> : vector<64x128xf32>
    %3 = tpu.matmul %1, %2, %cst {dimension_numbers = #tpu.dot_dimension_numbers<[1], [0], [0], [1], [0, 0, 1, 1], [], []>} : vector<64x64xf32>, vector<64x128xf32>, vector<64x128xf32> -> vector<64x128xf32>
    %4 = vector.shape_cast %3 : vector<64x128xf32> to vector<8x8x128xf32>
    %cst_3 = arith.constant dense<0xFF800000> : vector<8x128xf32>
    %5 = vector.multi_reduction <maximumf>, %4, %cst_3 [1] : vector<8x8x128xf32> to vector<8x128xf32>
    %c0_4 = arith.constant 0 : index
    %c0_5 = arith.constant 0 : index
    %6 = vector.load %arg3[%c0_4, %c0_5] : memref<1x128xf32, #tpu.memory_space<vmem>>, vector<1x128xf32>
    %7 = vector.broadcast %6 : vector<1x128xf32> to vector<8x128xf32>
    %8 = arith.addf %5, %7 : vector<8x128xf32>
    %cst_6 = arith.constant 0.000000e+00 : f32
    %9 = vector.broadcast %cst_6 : f32 to vector<8x128xf32>
    %10 = arith.maximumf %8, %9 : vector<8x128xf32>
    %c0_7 = arith.constant 0 : index
    %c0_8 = arith.constant 0 : index
    %11 = vector.load %arg4[%c0_7, %c0_8] : memref<128x128xf32, #tpu.memory_space<vmem>>, vector<128x128xf32>
    %cst_9 = arith.constant dense<0.000000e+00> : vector<8x128xf32>
    %12 = tpu.matmul %10, %11, %cst_9 {dimension_numbers = #tpu.dot_dimension_numbers<[1], [0], [0], [1], [0, 0, 1, 1], [], []>} : vector<8x128xf32>, vector<128x128xf32>, vector<8x128xf32> -> vector<8x128xf32>
    %c0_10 = arith.constant 0 : index
    %c0_11 = arith.constant 0 : index
    %13 = vector.load %arg5[%c0_10, %c0_11] : memref<1x128xf32, #tpu.memory_space<vmem>>, vector<1x128xf32>
    %14 = vector.broadcast %13 : vector<1x128xf32> to vector<8x128xf32>
    %15 = arith.addf %12, %14 : vector<8x128xf32>
    %c0_12 = arith.constant 0 : index
    %c0_13 = arith.constant 0 : index
    %16 = vector.load %arg6[%c0_12, %c0_13] : memref<8x128xf32, #tpu.memory_space<vmem>>, vector<8x128xf32>
    tpu.vector_store %arg6[%c0_12, %c0_13], %15 {strides = array<i32>} : memref<8x128xf32, #tpu.memory_space<vmem>>, vector<8x128xf32>,
    return
  }
  func.func @transform_0(%arg0: i32) -> (i32, i32) {
    %c0_i32 = arith.constant 0 : i32
    %c0_i32_0 = arith.constant 0 : i32
    %c0_i32_1 = arith.constant 0 : i32
    return %c0_i32, %c0_i32_0 : i32, i32
  }
  func.func @transform_1(%arg0: i32) -> (i32, i32) {
    %c0_i32 = arith.constant 0 : i32
    %c0_i32_0 = arith.constant 0 : i32
    %c0_i32_1 = arith.constant 0 : i32
    return %c0_i32, %c0_i32_0 : i32, i32
  }
  func.func @transform_2(%arg0: i32) -> (i32, i32) {
    %c0_i32 = arith.constant 0 : i32
    %c0_i32_0 = arith.constant 0 : i32
    %c0_i32_1 = arith.constant 0 : i32
    return %c0_i32, %c0_i32_0 : i32, i32
  }
  func.func @transform_3(%arg0: i32) -> (i32, i32) {
    %c0_i32 = arith.constant 0 : i32
    %c0_i32_0 = arith.constant 0 : i32
    %c0_i32_1 = arith.constant 0 : i32
    return %c0_i32, %c0_i32_0 : i32, i32
  }
  func.func @transform_4(%arg0: i32) -> (i32, i32) {
    %c0_i32 = arith.constant 0 : i32
    %c0_i32_0 = arith.constant 0 : i32
    %c0_i32_1 = arith.constant 0 : i32
    return %c0_i32, %c0_i32_0 : i32, i32
  }
  func.func @transform_5(%arg0: i32) -> (i32, i32) {
    %c0_i32 = arith.constant 0 : i32
    %c0_i32_0 = arith.constant 0 : i32
    %c0_i32_1 = arith.constant 0 : i32
    return %c0_i32, %c0_i32_0 : i32, i32
  }
}

</mosaic_0001>

<llo_original>
// kernel: tpu_custom_call.1
$region0: #{tpu_custom_call.1}
  #allocation0 [shape = 'u32[]', space=smem, size = 0x4, offset = 0x4, fixed_abs, tag = 'smem constant byte address 0x4 - core index']
  #allocation1 [shape = 'u32[72,128]{1,0:T(1,128)}', space=vmem, size = 0x9000, scoped, tag = 'internal scratch']
  %s0 = inlined_call_operand.hbm [shape: bf16[64,64], index: 0, kind: input, shape index: {}]
  %s1 = inlined_call_operand.hbm [shape: f32[64,128], index: 1, kind: input, shape index: {}]
  %s2 = inlined_call_operand.vmem [shape: f32[1,128], index: 2, kind: input, shape index: {}]
  %s3 = inlined_call_operand.hbm [shape: f32[128,128], index: 3, kind: input, shape index: {}]
  %s4 = inlined_call_operand.vmem [shape: f32[1,128], index: 4, kind: input, shape index: {}]
  %s5 = inlined_call_operand.hbm [shape: f32[8,128], index: 5, kind: output, shape index: {}]
  %s6 = sld [smem:[#allocation0]]
  $region42: #{tpu_custom_call.1} parent=0
    _
  %s8 = ssub.s32 1, %s6
  %s9 = scalar_select 0, %s8, %s6
  $region1: #{tpu_custom_call.1} parent=0
    #allocation2 [shape = 'u8[16384]{0}', space=vmem, size = 0x4000, scoped, tag = 'input window, operand 0, single buffered']
    #allocation3 [shape = 's32[1]{0}', space=sflag, size = 0x4, scoped, tag = 'scoped memory for tpu_custom_call.1']
    #allocation4 [shape = 's32[1]{0}', space=sflag, size = 0x4, scoped, tag = 'scoped memory for tpu_custom_call.1']
    #allocation5 [shape = 'u8[32768]{0}', space=vmem, size = 0x8000, scoped, tag = 'input window, operand 1, single buffered']
    #allocation6 [shape = 's32[1]{0}', space=sflag, size = 0x4, scoped, tag = 'scoped memory for tpu_custom_call.1']
    #allocation7 [shape = 'u8[65536]{0}', space=vmem, size = 0x10000, scoped, tag = 'input window, operand 3, single buffered']
    #allocation8 [shape = 'u8[4096]{0}', space=vmem, size = 0x1000, scoped, tag = 'output window, operand 0, single buffered']
    %10 = vsyncpa [#allocation3], 0
    %11 = vsyncpa [#allocation6], 0
    %12 = vsyncpa [#allocation4], 0
    // Predicated region
    $region2: #{tpu_custom_call.1} parent=1 // pred_check
      _
    $region3: #{tpu_custom_call.1} parent=1 // pred_check_branch
      %14 = sbr.rel (0) target = $region5
    $region4: #{tpu_custom_call.1} parent=1 // pred_region
      %16 = vsyncadd [#allocation3], 0
      %s17 = sshll.u32 %s0, 4
      %s18 = int_to_ptr.hbm [resolvable:$true] %s17
      %s19 = sshll.u32 [#allocation2], 4
      %s20 = int_to_ptr.vmem [resolvable:$true] %s19
      %25 = dma.hbm_to_vmem [thread:$0]  %s18, 512, %s20, [#allocation3], 64, 64, 4
    $region5: #{tpu_custom_call.1} parent=1 // pred_fallthru
      _
    // Predicated region
    $region6: #{tpu_custom_call.1} parent=1 // pred_check
      _
    $region7: #{tpu_custom_call.1} parent=1 // pred_check_branch
      %27 = sbr.rel (0) target = $region9
    $region8: #{tpu_custom_call.1} parent=1 // pred_region
      %29 = vsyncadd [#allocation6], 0
      %s30 = sshll.u32 %s1, 4
      %s31 = int_to_ptr.hbm [resolvable:$true] %s30
      %s32 = sshll.u32 [#allocation5], 4
      %s33 = int_to_ptr.vmem [resolvable:$true] %s32
      %38 = dma.hbm_to_vmem [thread:$0]  %s31, 1024, %s33, [#allocation6], 128, 128, 8
    $region9: #{tpu_custom_call.1} parent=1 // pred_fallthru
      _
    // Predicated region
    $region10: #{tpu_custom_call.1} parent=1 // pred_check
      _
    $region11: #{tpu_custom_call.1} parent=1 // pred_check_branch
      %40 = sbr.rel (0) target = $region13
    $region12: #{tpu_custom_call.1} parent=1 // pred_region
      _
    $region13: #{tpu_custom_call.1} parent=1 // pred_fallthru
      _
    // Predicated region
    $region14: #{tpu_custom_call.1} parent=1 // pred_check
      _
    $region15: #{tpu_custom_call.1} parent=1 // pred_check_branch
      %42 = sbr.rel (0) target = $region17
    $region16: #{tpu_custom_call.1} parent=1 // pred_region
      %44 = vsyncadd [#allocation6], 0
      %s45 = sshll.u32 %s3, 4
      %s46 = int_to_ptr.hbm [resolvable:$true] %s45
      %s47 = sshll.u32 [#allocation7], 4
      %s48 = int_to_ptr.vmem [resolvable:$true] %s47
      %53 = dma.hbm_to_vmem [thread:$0]  %s46, 2048, %s48, [#allocation6], 128, 128, 8
    $region17: #{tpu_custom_call.1} parent=1 // pred_fallthru
      _
    // Predicated region
    $region18: #{tpu_custom_call.1} parent=1 // pred_check
      _
    $region19: #{tpu_custom_call.1} parent=1 // pred_check_branch
      %55 = sbr.rel (0) target = $region21
    $region20: #{tpu_custom_call.1} parent=1 // pred_region
      _
    $region21: #{tpu_custom_call.1} parent=1 // pred_fallthru
      _
    // Predicated region
    $region22: #{tpu_custom_call.1} parent=1 // pred_check
      _
    $region23: #{tpu_custom_call.1} parent=1 // pred_check_branch
      %57 = sbr.rel (0) target = $region25
    $region24: #{tpu_custom_call.1} parent=1 // pred_region
      %59 = dma.done [#allocation3], 512
    $region25: #{tpu_custom_call.1} parent=1 // pred_fallthru
      _
    // Predicated region
    $region26: #{tpu_custom_call.1} parent=1 // pred_check
      _
    $region27: #{tpu_custom_call.1} parent=1 // pred_check_branch
      %61 = sbr.rel (0) target = $region29
    $region28: #{tpu_custom_call.1} parent=1 // pred_region
      %63 = dma.done [#allocation6], 1024
    $region29: #{tpu_custom_call.1} parent=1 // pred_fallthru
      _
    // Predicated region
    $region30: #{tpu_custom_call.1} parent=1 // pred_check
      _
    $region31: #{tpu_custom_call.1} parent=1 // pred_check_branch
      %65 = sbr.rel (0) target = $region33
    $region32: #{tpu_custom_call.1} parent=1 // pred_region
      %67 = dma.done [#allocation6], 2048
    $region33: #{tpu_custom_call.1} parent=1 // pred_fallthru
      _
    %v68 = vld [vmem:[#allocation2] sm:$0xf]
    %v69 = vld [vmem:[#allocation2 + $0x4] sm:$0xf]
    %v70 = vld [vmem:[#allocation2 + $0x8] sm:$0xf]
    %v71 = vld [vmem:[#allocation2 + $0xc] sm:$0xf]
    %v72 = vld [vmem:[#allocation2 + $0x10] sm:$0xf]
    %v73 = vld [vmem:[#allocation2 + $0x14] sm:$0xf]
    %v74 = vld [vmem:[#allocation2 + $0x18] sm:$0xf]
    %v75 = vld [vmem:[#allocation2 + $0x1c] sm:$0xf]
    %v76 = vunpack.c.l.bf16 %v68
    %v77 = vunpack.c.l.bf16 %v69
    %v78 = vunpack.c.l.bf16 %v70
    %v79 = vunpack.c.l.bf16 %v71
    %v80 = vunpack.c.l.bf16 %v72
    %v81 = vunpack.c.l.bf16 %v73
    %v82 = vunpack.c.l.bf16 %v74
    %v83 = vunpack.c.l.bf16 %v75
    %v84 = vld [vmem:[#allocation5] sm:$0xff]
    %v85 = vld [vmem:[#allocation5 + $0x8] sm:$0xff]
    %v86 = vld [vmem:[#allocation5 + $0x10] sm:$0xff]
    %v87 = vld [vmem:[#allocation5 + $0x18] sm:$0xff]
    %v88 = vld [vmem:[#allocation5 + $0x20] sm:$0xff]
    %v89 = vld [vmem:[#allocation5 + $0x28] sm:$0xff]
    %v90 = vld [vmem:[#allocation5 + $0x30] sm:$0xff]
    %v91 = vld [vmem:[#allocation5 + $0x38] sm:$0xff]
    %vm92 = vcmask 523264
    %v94 = vsel %vm92, %v76, 0
    %v97 = vsel %vm92, %v77, 0
    %v100 = vsel %vm92, %v78, 0
    %v103 = vsel %vm92, %v79, 0
    %v106 = vsel %vm92, %v80, 0
    %v109 = vsel %vm92, %v81, 0
    %v112 = vsel %vm92, %v82, 0
    %v115 = vsel %vm92, %v83, 0
    %117 = vmatpush.msra.mxu0 0.0
    %118 = vmatpush.msra.mxu0 0.0
    %119 = vmatpush.msra.mxu0 0.0
    %120 = vmatpush.msra.mxu0 0.0
    %121 = vmatpush.msra.mxu0 0.0
    %122 = vmatpush.msra.mxu0 0.0
    %123 = vmatpush.msra.mxu0 0.0
    %124 = vmatpush.msra.mxu0 0.0
    %125 = vmatpush.msra.mxu0 %v91
    %126 = vmatpush.msra.mxu0 %v90
    %127 = vmatpush.msra.mxu0 %v89
    %128 = vmatpush.msra.mxu0 %v88
    %129 = vmatpush.msra.mxu0 %v87
    %130 = vmatpush.msra.mxu0 %v86
    %131 = vmatpush.msra.mxu0 %v85
    %132 = vmatpush.msra.mxu0 %v84
    %133 = vmatmul.f32.gmra.mxu0 %v94
    %v134 = vpop.f32.mrf.mxu0
    %v135 = vadd.f32 0.0, %v134
    %136 = vmatmul.f32.gmra.mxu0 %v97
    %v137 = vpop.f32.mrf.mxu0
    %v138 = vadd.f32 0.0, %v137
    %139 = vmatmul.f32.gmra.mxu0 %v100
    %v140 = vpop.f32.mrf.mxu0
    %v141 = vadd.f32 0.0, %v140
    %142 = vmatmul.f32.gmra.mxu0 %v103
    %v143 = vpop.f32.mrf.mxu0
    %v144 = vadd.f32 0.0, %v143
    %145 = vmatmul.f32.gmra.mxu0 %v106
    %v146 = vpop.f32.mrf.mxu0
    %v147 = vadd.f32 0.0, %v146
    %148 = vmatmul.f32.gmra.mxu0 %v109
    %v149 = vpop.f32.mrf.mxu0
    %v150 = vadd.f32 0.0, %v149
    %151 = vmatmul.f32.gmra.mxu0 %v112
    %v152 = vpop.f32.mrf.mxu0
    %v153 = vadd.f32 0.0, %v152
    %154 = vmatmul.f32.gmra.mxu0 %v115
    %v155 = vpop.f32.mrf.mxu0
    %v156 = vadd.f32 0.0, %v155
    %157 = vdwg.mxu0
    %v158 = vrot.slane %v135, 4
    %v159 = vmax.f32 %v135, %v158
    %v160 = vrot.slane %v159, 2
    %v161 = vmax.f32 %v159, %v160
    %v162 = vrot.slane %v161, 1
    %v163 = vmax.f32 %v161, %v162
    %v164 = vrot.slane %v138, 4
    %v165 = vmax.f32 %v138, %v164
    %v166 = vrot.slane %v165, 2
    %v167 = vmax.f32 %v165, %v166
    %v168 = vrot.slane %v167, 1
    %v169 = vmax.f32 %v167, %v168
    %v170 = vrot.slane %v141, 4
    %v171 = vmax.f32 %v141, %v170
    %v172 = vrot.slane %v171, 2
    %v173 = vmax.f32 %v171, %v172
    %v174 = vrot.slane %v173, 1
    %v175 = vmax.f32 %v173, %v174
    %v176 = vrot.slane %v144, 4
    %v177 = vmax.f32 %v144, %v176
    %v178 = vrot.slane %v177, 2
    %v179 = vmax.f32 %v177, %v178
    %v180 = vrot.slane %v179, 1
    %v181 = vmax.f32 %v179, %v180
    %v182 = vrot.slane %v147, 4
    %v183 = vmax.f32 %v147, %v182
    %v184 = vrot.slane %v183, 2
    %v185 = vmax.f32 %v183, %v184
    %v186 = vrot.slane %v185, 1
    %v187 = vmax.f32 %v185, %v186
    %v188 = vrot.slane %v150, 4
    %v189 = vmax.f32 %v150, %v188
    %v190 = vrot.slane %v189, 2
    %v191 = vmax.f32 %v189, %v190
    %v192 = vrot.slane %v191, 1
    %v193 = vmax.f32 %v191, %v192
    %v194 = vrot.slane %v153, 4
    %v195 = vmax.f32 %v153, %v194
    %v196 = vrot.slane %v195, 2
    %v197 = vmax.f32 %v195, %v196
    %v198 = vrot.slane %v197, 1
    %v199 = vmax.f32 %v197, %v198
    %v200 = vrot.slane %v156, 4
    %v201 = vmax.f32 %v156, %v200
    %v202 = vrot.slane %v201, 2
    %v203 = vmax.f32 %v201, %v202
    %v204 = vrot.slane %v203, 1
    %v205 = vmax.f32 %v203, %v204
    %v206 = vld [vmem:[%s2] sm:$0x1]
    %v208 = vperm.slane %v206, 0
    %v210 = vadd.f32 %v163, %v208
    %v211 = vadd.f32 %v169, %v208
    %v212 = vadd.f32 %v175, %v208
    %v213 = vadd.f32 %v181, %v208
    %v214 = vadd.f32 %v187, %v208
    %v215 = vadd.f32 %v193, %v208
    %v216 = vadd.f32 %v199, %v208
    %v217 = vadd.f32 %v205, %v208
    %v218 = vmax.f32 %v210, 0.0
    %v219 = vmax.f32 %v211, 0.0
    %v220 = vmax.f32 %v212, 0.0
    %v221 = vmax.f32 %v213, 0.0
    %v222 = vmax.f32 %v214, 0.0
    %v223 = vmax.f32 %v215, 0.0
    %v224 = vmax.f32 %v216, 0.0
    %v225 = vmax.f32 %v217, 0.0
    %v226 = vld [vmem:[#allocation7] sm:$0xff]
    %v227 = vld [vmem:[#allocation7 + $0x8] sm:$0xff]
    %v228 = vld [vmem:[#allocation7 + $0x10] sm:$0xff]
    %v229 = vld [vmem:[#allocation7 + $0x18] sm:$0xff]
    %v230 = vld [vmem:[#allocation7 + $0x20] sm:$0xff]
    %v231 = vld [vmem:[#allocation7 + $0x28] sm:$0xff]
    %v232 = vld [vmem:[#allocation7 + $0x30] sm:$0xff]
    %v233 = vld [vmem:[#allocation7 + $0x38] sm:$0xff]
    %v234 = vld [vmem:[#allocation7 + $0x40] sm:$0xff]
    %v235 = vld [vmem:[#allocation7 + $0x48] sm:$0xff]
    %v236 = vld [vmem:[#allocation7 + $0x50] sm:$0xff]
    %v237 = vld [vmem:[#allocation7 + $0x58] sm:$0xff]
    %v238 = vld [vmem:[#allocation7 + $0x60] sm:$0xff]
    %v239 = vld [vmem:[#allocation7 + $0x68] sm:$0xff]
    %v240 = vld [vmem:[#allocation7 + $0x70] sm:$0xff]
    %v241 = vld [vmem:[#allocation7 + $0x78] sm:$0xff]
    %v242 = vld [vmem:[%s4] sm:$0x1]
    %v244 = vperm.slane %v242, 0
    %v254 = vrot.slane %v219, 7
    %vm255 = vcmask 1041409
    %v256 = vsel %vm255, %v254, %v218
    %v257 = vrot.slane %v220, 6
    %vm258 = vcmask 1042434
    %v259 = vsel %vm258, %v257, %v256
    %v260 = vrot.slane %v221, 5
    %vm261 = vcmask 1043459
    %v262 = vsel %vm261, %v260, %v259
    %v263 = vrot.slane %v222, 4
    %vm264 = vcmask 1044484
    %v265 = vsel %vm264, %v263, %v262
    %v266 = vrot.slane %v223, 3
    %vm267 = vcmask 1045509
    %v268 = vsel %vm267, %v266, %v265
    %v269 = vrot.slane %v224, 2
    %vm270 = vcmask 1046534
    %v271 = vsel %vm270, %v269, %v268
    %v272 = vrot.slane %v225, 1
    %vm273 = vcmask 1047559
    %v274 = vsel %vm273, %v272, %v271
    %276 = vmatpush.msra.mxu0 %v241
    %277 = vmatpush.msra.mxu0 %v240
    %278 = vmatpush.msra.mxu0 %v239
    %279 = vmatpush.msra.mxu0 %v238
    %280 = vmatpush.msra.mxu0 %v237
    %281 = vmatpush.msra.mxu0 %v236
    %282 = vmatpush.msra.mxu0 %v235
    %283 = vmatpush.msra.mxu0 %v234
    %284 = vmatpush.msra.mxu0 %v233
    %285 = vmatpush.msra.mxu0 %v232
    %286 = vmatpush.msra.mxu0 %v231
    %287 = vmatpush.msra.mxu0 %v230
    %288 = vmatpush.msra.mxu0 %v229
    %289 = vmatpush.msra.mxu0 %v228
    %290 = vmatpush.msra.mxu0 %v227
    %291 = vmatpush.msra.mxu0 %v226
    %292 = vmatmul.f32.gmra.mxu0 %v274
    %v293 = vpop.f32.mrf.mxu0
    %v294 = vadd.f32 %v244, %v293
    %295 = vdwg.mxu0
    %296 = vst [vmem:[#allocation8] sm:$0xff] %v294
    // Predicated region
    $region34: #{tpu_custom_call.1} parent=1 // pred_check
      _
    $region35: #{tpu_custom_call.1} parent=1 // pred_check_branch
      %298 = sbr.rel (0) target = $region37
    $region36: #{tpu_custom_call.1} parent=1 // pred_region
      %300 = vsyncadd [#allocation4], 0
      %s302 = sshll.u32 [#allocation8], 4
      %s303 = int_to_ptr.vmem [resolvable:$true] %s302
      %s304 = sshll.u32 %s5, 4
      %s305 = int_to_ptr.hbm [resolvable:$true] %s304
      %307 = dma.vmem_to_hbm [thread:$0]  %s303, 128, %s305, [#allocation4]
    $region37: #{tpu_custom_call.1} parent=1 // pred_fallthru
      _
    // Predicated region
    $region38: #{tpu_custom_call.1} parent=1 // pred_check
      _
    $region39: #{tpu_custom_call.1} parent=1 // pred_check_branch
      %309 = sbr.rel (0) target = $region41
    $region40: #{tpu_custom_call.1} parent=1 // pred_region
      %311 = dma.done [#allocation4], 128
    $region41: #{tpu_custom_call.1} parent=1 // pred_fallthru
      _
    %312 = vsyncpa [#allocation3], 1
    %313 = vsyncpa [#allocation6], 1
    %314 = vsyncpa [#allocation4], 1

</llo_original>
